<compile_context>
chip_gen: v7x
topology: tpu7x:2x2x1
jax: 0.10.0
libtpu: 0.0.40
codegen_flags: <defaults>
</compile_context>

<pallas_src>
import jax
import jax.numpy as jnp
from jax.experimental import pallas as pl
from jax.experimental.pallas import tpu as pltpu


# ---------------------------------------------------------------------------
# Helpers
# ---------------------------------------------------------------------------
def _round_up(x, m):
    return (x + m - 1) // m * m


def _pad_to(a, shape):
    pads = [(0, t - s) for s, t in zip(a.shape, shape)]
    if any(p[1] for p in pads):
        a = jnp.pad(a, pads)
    return a


def _vmem_capacity_bytes():
    """Physical VMEM per TensorCore; conservative fallback is v7x's 64 MiB."""
    try:
        return int(pltpu.get_tpu_info().vmem_capacity_bytes)
    except Exception:
        return 64 * 1024 * 1024


def _vmem_estimate(tm, tf, d_model_p, in_bytes, out_bytes, need_acc):
    """Trace-time VMEM audit: double-buffered pipeline buffers + acc scratch."""
    b = 2 * tm * d_model_p * in_bytes          # x tile
    b += 2 * d_model_p * tf * in_bytes         # W1 panel
    b += 2 * tf * d_model_p * in_bytes         # W2 panel
    b += 2 * tf * 4 + 2 * d_model_p * 4        # f32 biases
    b += 2 * tm * d_model_p * out_bytes        # output tile
    if need_acc:
        b += tm * d_model_p * 4                # persistent f32 accumulator
    return b


# ---------------------------------------------------------------------------
# Kernels
# ---------------------------------------------------------------------------
def ffn_kernel_resident(x_ref, w1_ref, b1_ref, w2_ref, b2_ref, o_ref):
    """Whole (padded) W1/W2 are VMEM-resident: one fused pass per token tile."""
    h = jnp.dot(x_ref[...], w1_ref[...], preferred_element_type=jnp.float32)
    h = jnp.maximum(h + b1_ref[...], 0.0)
    p = jnp.dot(h.astype(w2_ref.dtype), w2_ref[...],
                preferred_element_type=jnp.float32)
    # Dropout == identity (eval mode); b2 added exactly once.
    o_ref[...] = (p + b2_ref[...]).astype(o_ref.dtype)


def ffn_kernel_streamed(x_ref, w1_ref, b1_ref, w2_ref, b2_ref, o_ref, acc_ref):
    """d_ff streamed in tf-wide panels; f32 accumulator; fused final epilogue.

    Only used with >= 2 reduction steps, so f == 0 and f == last never coincide.
    """
    f = pl.program_id(1)
    last = pl.num_programs(1) - 1

    h = jnp.dot(x_ref[...], w1_ref[...], preferred_element_type=jnp.float32)
    h = jnp.maximum(h + b1_ref[...], 0.0)
    p = jnp.dot(h.astype(w2_ref.dtype), w2_ref[...],
                preferred_element_type=jnp.float32)

    @pl.when(f == 0)
    def _():
        acc_ref[...] = p

    @pl.when(jnp.logical_and(f != 0, f != last))
    def _():
        acc_ref[...] += p

    @pl.when(f == last)
    def _():
        # Final panel's partial product goes straight to the output (no extra
        # acc read-modify-write); b2 added once; dropout == identity.
        o_ref[...] = (acc_ref[...] + p + b2_ref[...]).astype(o_ref.dtype)


# ---------------------------------------------------------------------------
# Wrapper
# ---------------------------------------------------------------------------
def prepare_ffn_weights(w1, b1, w2, b2, *, compute_dtype=jnp.bfloat16,
                        tm=None, tf=None, force_streamed=False):
    """Pad + cast the FFN weights once (hoisted out of the per-call hot path).

    w1: [d_model, d_ff], w2: [d_ff, d_model] — already the (in, out) layout,
    i.e. the transpose of PyTorch nn.Linear's (out, in) storage.
    Returns a dict consumed by ffn_forward().
    """
    d_model, d_ff = w1.shape
    assert w2.shape == (d_ff, d_model)
    in_dt = jnp.dtype(compute_dtype)
    in_bytes = in_dt.itemsize

    vmem_cap = _vmem_capacity_bytes()
    vmem_limit = min(vmem_cap * 3 // 4, 100 * 1024 * 1024)
    budget = vmem_limit - (2 << 20)             # headroom for internal scratch

    # Default token tile: 512 on 64-MiB-VMEM chips (v7x), 1024 on 128-MiB chips.
    tm_hint = tm if tm is not None else (512 if vmem_cap <= (64 << 20) else 1024)
    tm_hint = max(16, _round_up(tm_hint, 16))

    d_model_p = _round_up(d_model, 128)
    d_ff_p = _round_up(d_ff, 128)

    # Weight-resident fast path: full W1/W2 live in VMEM, fetched from HBM once.
    resident = (not force_streamed) and _vmem_estimate(
        tm_hint, d_ff_p, d_model_p, in_bytes, 4, need_acc=False) <= budget

    if resident:
        tf_eff = d_ff_p
    else:
        tf_eff = min(tf if tf is not None else 1024, d_ff_p)
        tf_eff = max(128, _round_up(tf_eff, 128))
        while tf_eff > 128 and _vmem_estimate(
                tm_hint, tf_eff, d_model_p, in_bytes, 4, True) > budget:
            tf_eff = max(128, _round_up(tf_eff // 2, 128))
        d_ff_p = _round_up(d_ff, tf_eff)        # tf must divide the padded d_ff
        if d_ff_p // tf_eff == 1:               # reduction collapses anyway
            resident = True
            tf_eff = d_ff_p

    w1p = _pad_to(w1.astype(in_dt), (d_model_p, d_ff_p))
    w2p = _pad_to(w2.astype(in_dt), (d_ff_p, d_model_p))
    # Biases stay f32: they are added to the f32 MXU results / accumulator.
    b1p = _pad_to(b1.reshape(1, d_ff).astype(jnp.float32), (1, d_ff_p))
    b2p = _pad_to(b2.reshape(1, d_model).astype(jnp.float32), (1, d_model_p))

    return dict(w1=w1p, b1=b1p, w2=w2p, b2=b2p,
                d_model=d_model, d_ff=d_ff,
                d_model_p=d_model_p, d_ff_p=d_ff_p,
                tf=tf_eff, resident=resident, compute_dtype=in_dt,
                tm_hint=tm_hint, vmem_limit=vmem_limit, budget=budget)


def ffn_forward(x, params):
    """x: [B, S, d_model] -> [B, S, d_model].  Eval-mode dropout (identity)."""
    B, S, d_model = x.shape
    assert d_model == params["d_model"]
    out_dtype = x.dtype
    in_dt = params["compute_dtype"]
    in_bytes = in_dt.itemsize
    out_bytes = jnp.dtype(out_dtype).itemsize
    d_model_p, d_ff_p, tf = params["d_model_p"], params["d_ff_p"], params["tf"]
    resident = params["resident"]
    budget = params["budget"]

    N = B * S
    sublane = 16 if in_bytes == 2 else 8
    n_p = _round_up(N, sublane)

    # Activations: pad only to the sublane multiple / lane-dense feature width.
    x2d = _pad_to(x.reshape(N, d_model).astype(in_dt), (n_p, d_model_p))

    # Token tile: as large as the VMEM budget allows; keep >= 2 tiles when
    # possible so v7x's two TensorCores both get work (a partial last tile is
    # masked by Pallas — padded rows only produce rows that get sliced off).
    tm = min(params["tm_hint"], n_p)
    if n_p >= 2 * sublane and pl.cdiv(n_p, tm) < 2:
        tm = _round_up(pl.cdiv(n_p, 2), sublane)
    while tm > sublane and _vmem_estimate(
            tm, tf, d_model_p, in_bytes, out_bytes, not resident) > budget:
        tm = max(sublane, _round_up(tm // 2, sublane))

    n_row_tiles = int(pl.cdiv(n_p, tm))
    n_ff_tiles = d_ff_p // tf

    # Advisory cost: W1/W2 are re-streamed once per token tile when streamed,
    # fetched exactly once when VMEM-resident.
    weight_bytes = 2 * d_model_p * d_ff_p * in_bytes
    bytes_accessed = (n_p * d_model_p * in_bytes
                      + weight_bytes * (1 if resident else n_row_tiles)
                      + (d_ff_p + d_model_p) * 4
                      + n_p * d_model_p * out_bytes)
    cost = pl.CostEstimate(flops=4 * n_p * d_model_p * d_ff_p,
                           transcendentals=0,
                           bytes_accessed=int(bytes_accessed))

    compiler_params = pltpu.CompilerParams(
        dimension_semantics=("parallel",) if resident
        else ("parallel", "arbitrary"),
        vmem_limit_bytes=params["vmem_limit"],
    )

    if resident:
        grid_spec = pltpu.PrefetchScalarGridSpec(
            num_scalar_prefetch=0,
            grid=(n_row_tiles,),
            in_specs=[
                pl.BlockSpec((tm, d_model_p), lambda i: (i, 0)),       # x
                pl.BlockSpec((d_model_p, d_ff_p), lambda i: (0, 0)),   # W1
                pl.BlockSpec((1, d_ff_p), lambda i: (0, 0)),           # b1
                pl.BlockSpec((d_ff_p, d_model_p), lambda i: (0, 0)),   # W2
                pl.BlockSpec((1, d_model_p), lambda i: (0, 0)),        # b2
            ],
            out_specs=pl.BlockSpec((tm, d_model_p), lambda i: (i, 0)),
        )
        kernel = ffn_kernel_resident
    else:
        grid_spec = pltpu.PrefetchScalarGridSpec(
            num_scalar_prefetch=0,
            grid=(n_row_tiles, n_ff_tiles),
            in_specs=[
                pl.BlockSpec((tm, d_model_p), lambda i, f: (i, 0)),    # x
                pl.BlockSpec((d_model_p, tf), lambda i, f: (0, f)),    # W1 panel
                pl.BlockSpec((1, tf), lambda i, f: (0, f)),            # b1 slice
                pl.BlockSpec((tf, d_model_p), lambda i, f: (f, 0)),    # W2 panel
                pl.BlockSpec((1, d_model_p), lambda i, f: (0, 0)),     # b2
            ],
            out_specs=pl.BlockSpec((tm, d_model_p), lambda i, f: (i, 0)),
            scratch_shapes=[pltpu.VMEM((tm, d_model_p), jnp.float32)],
        )
        kernel = ffn_kernel_streamed

    out2d = pl.pallas_call(
        kernel,
        out_shape=jax.ShapeDtypeStruct((n_p, d_model_p), out_dtype),
        grid_spec=grid_spec,
        compiler_params=compiler_params,
        cost_estimate=cost,
    )(x2d, params["w1"], params["b1"], params["w2"], params["b2"])

    return out2d[:N, :d_model].reshape(B, S, d_model)


def ffn(x, w1, b1, w2, b2, **prepare_kwargs):
    """Convenience wrapper: prepare (pad/cast) weights, then run the kernel.

    In production, call prepare_ffn_weights() once and reuse the result across
    forward calls so weight padding/casting stays out of the hot path.
    """
    return ffn_forward(x, prepare_ffn_weights(w1, b1, w2, b2, **prepare_kwargs))


if __name__ == "__main__":
    # Small, deterministic setup consistent with the module's forward.
    B, S, d_model, d_ff = 2, 8, 64, 256

    key = jax.random.PRNGKey(0)
    kx, kw1, kb1, kw2, kb2 = jax.random.split(key, 5)

    x = jax.random.normal(kx, (B, S, d_model), dtype=jnp.float32)
    # PyTorch nn.Linear stores (out_features, in_features) and does x @ W^T + b;
    # we generate the already-transposed (in, out) layout directly.
    w1 = jax.random.normal(kw1, (d_model, d_ff), dtype=jnp.float32) * 0.05
    b1 = jax.random.normal(kb1, (d_ff,), dtype=jnp.float32) * 0.05
    w2 = jax.random.normal(kw2, (d_ff, d_model), dtype=jnp.float32) * 0.05
    b2 = jax.random.normal(kb2, (d_model,), dtype=jnp.float32) * 0.05

    # Pure-JAX reference (eval-mode dropout == identity).
    ref = jnp.maximum(x @ w1 + b1, 0.0) @ w2 + b2

    # 1) Default path: bf16 MXU inputs, f32 accumulation, weights VMEM-resident.
    out = ffn(x, w1, b1, w2, b2)
    jax.block_until_ready(out)
    assert out.shape == (B, S, d_model) and out.dtype == x.dtype
    assert jnp.allclose(out, ref, atol=3e-2, rtol=3e-2), \
        f"bf16 resident max abs err {float(jnp.max(jnp.abs(out - ref)))}"

    # 2) Full-f32 MXU path (tight check).
    out_f32 = ffn(x, w1, b1, w2, b2, compute_dtype=jnp.float32)
    jax.block_until_ready(out_f32)
    assert jnp.allclose(out_f32, ref, atol=2e-4, rtol=2e-4), \
        f"f32 max abs err {float(jnp.max(jnp.abs(out_f32 - ref)))}"

    # 3) Streamed fallback (d_ff panels + fused-epilogue accumulator), forced
    #    so both kernel variants are compiled and checked.
    out_st = ffn(x, w1, b1, w2, b2, force_streamed=True, tf=128)
    jax.block_until_ready(out_st)
    assert jnp.allclose(out_st, ref, atol=3e-2, rtol=3e-2), \
        f"bf16 streamed max abs err {float(jnp.max(jnp.abs(out_st - ref)))}"

    print("KERNEL_OK")
</pallas_src>

<mosaic_0001>
module attributes {stable_mosaic.version = 11 : i64} {
  func.func @ffn_kernel_resident(%arg0: i32, %arg1: memref<16x128xbf16, #tpu.memory_space<vmem>>, %arg2: memref<128x256xbf16, #tpu.memory_space<vmem>>, %arg3: memref<1x256xf32, #tpu.memory_space<vmem>>, %arg4: memref<256x128xbf16, #tpu.memory_space<vmem>>, %arg5: memref<1x128xf32, #tpu.memory_space<vmem>>, %arg6: memref<16x128xf32, #tpu.memory_space<vmem>>) attributes {dimension_semantics = [#tpu.dimension_semantics<parallel>], iteration_bounds = array<i64: 1>, scalar_prefetch = 0 : i64, scratch_operands = 0 : i64, tpu.core_type = #tpu.core_type<tc>, window_params = [{transform_indices = @transform_0, window_bounds = array<i64: 16, 128>}, {pipeline_mode = #tpu.pipeline_mode<synchronous>, transform_indices = @transform_1, window_bounds = array<i64: 128, 256>}, {pipeline_mode = #tpu.pipeline_mode<synchronous>, transform_indices = @transform_2, window_bounds = array<i64: 1, 256>}, {pipeline_mode = #tpu.pipeline_mode<synchronous>, transform_indices = @transform_3, window_bounds = array<i64: 256, 128>}, {pipeline_mode = #tpu.pipeline_mode<synchronous>, transform_indices = @transform_4, window_bounds = array<i64: 1, 128>}, {transform_indices = @transform_5, window_bounds = array<i64: 16, 128>}]} {
    %c0 = arith.constant 0 : index
    %c0_0 = arith.constant 0 : index
    %0 = vector.load %arg1[%c0, %c0_0] : memref<16x128xbf16, #tpu.memory_space<vmem>>, vector<16x128xbf16>
    %c0_1 = arith.constant 0 : index
    %c0_2 = arith.constant 0 : index
    %1 = vector.load %arg2[%c0_1, %c0_2] : memref<128x256xbf16, #tpu.memory_space<vmem>>, vector<128x256xbf16>
    %cst = arith.constant dense<0.000000e+00> : vector<16x256xf32>
    %2 = tpu.matmul %0, %1, %cst {dimension_numbers = #tpu.dot_dimension_numbers<[1], [0], [0], [1], [0, 0, 1, 1], [], []>} : vector<16x128xbf16>, vector<128x256xbf16>, vector<16x256xf32> -> vector<16x256xf32>
    %c0_3 = arith.constant 0 : index
    %c0_4 = arith.constant 0 : index
    %3 = vector.load %arg3[%c0_3, %c0_4] : memref<1x256xf32, #tpu.memory_space<vmem>>, vector<1x256xf32>
    %4 = vector.broadcast %3 : vector<1x256xf32> to vector<16x256xf32>
    %5 = arith.addf %2, %4 : vector<16x256xf32>
    %cst_5 = arith.constant 0.000000e+00 : f32
    %6 = vector.broadcast %cst_5 : f32 to vector<16x256xf32>
    %7 = arith.maximumf %5, %6 : vector<16x256xf32>
    %8 = arith.truncf %7 : vector<16x256xf32> to vector<16x256xbf16>
    %c0_6 = arith.constant 0 : index
    %c0_7 = arith.constant 0 : index
    %9 = vector.load %arg4[%c0_6, %c0_7] : memref<256x128xbf16, #tpu.memory_space<vmem>>, vector<256x128xbf16>
    %cst_8 = arith.constant dense<0.000000e+00> : vector<16x128xf32>
    %10 = tpu.matmul %8, %9, %cst_8 {dimension_numbers = #tpu.dot_dimension_numbers<[1], [0], [0], [1], [0, 0, 1, 1], [], []>} : vector<16x256xbf16>, vector<256x128xbf16>, vector<16x128xf32> -> vector<16x128xf32>
    %c0_9 = arith.constant 0 : index
    %c0_10 = arith.constant 0 : index
    %11 = vector.load %arg5[%c0_9, %c0_10] : memref<1x128xf32, #tpu.memory_space<vmem>>, vector<1x128xf32>
    %12 = vector.broadcast %11 : vector<1x128xf32> to vector<16x128xf32>
    %13 = arith.addf %10, %12 : vector<16x128xf32>
    %c0_11 = arith.constant 0 : index
    %c0_12 = arith.constant 0 : index
    %14 = vector.load %arg6[%c0_11, %c0_12] : memref<16x128xf32, #tpu.memory_space<vmem>>, vector<16x128xf32>
    tpu.vector_store %arg6[%c0_11, %c0_12], %13 {strides = array<i32>} : memref<16x128xf32, #tpu.memory_space<vmem>>, vector<16x128xf32>,
    return
  }
  func.func @transform_0(%arg0: i32) -> (i32, i32) {
    %c0_i32 = arith.constant 0 : i32
    %c0_i32_0 = arith.constant 0 : i32
    return %arg0, %c0_i32 : i32, i32
  }
  func.func @transform_1(%arg0: i32) -> (i32, i32) {
    %c0_i32 = arith.constant 0 : i32
    %c0_i32_0 = arith.constant 0 : i32
    %c0_i32_1 = arith.constant 0 : i32
    return %c0_i32, %c0_i32_0 : i32, i32
  }
  func.func @transform_2(%arg0: i32) -> (i32, i32) {
    %c0_i32 = arith.constant 0 : i32
    %c0_i32_0 = arith.constant 0 : i32
    %c0_i32_1 = arith.constant 0 : i32
    return %c0_i32, %c0_i32_0 : i32, i32
  }
  func.func @transform_3(%arg0: i32) -> (i32, i32) {
    %c0_i32 = arith.constant 0 : i32
    %c0_i32_0 = arith.constant 0 : i32
    %c0_i32_1 = arith.constant 0 : i32
    return %c0_i32, %c0_i32_0 : i32, i32
  }
  func.func @transform_4(%arg0: i32) -> (i32, i32) {
    %c0_i32 = arith.constant 0 : i32
    %c0_i32_0 = arith.constant 0 : i32
    %c0_i32_1 = arith.constant 0 : i32
    return %c0_i32, %c0_i32_0 : i32, i32
  }
  func.func @transform_5(%arg0: i32) -> (i32, i32) {
    %c0_i32 = arith.constant 0 : i32
    %c0_i32_0 = arith.constant 0 : i32
    return %arg0, %c0_i32 : i32, i32
  }
}

</mosaic_0001>

<llo_original>
// kernel: tpu_custom_call.1
$region0: #{tpu_custom_call.1}
  #allocation0 [shape = 'u32[]', space=smem, size = 0x4, offset = 0x4, fixed_abs, tag = 'smem constant byte address 0x4 - core index']
  #allocation1 [shape = 'u32[144,128]{1,0:T(1,128)}', space=vmem, size = 0x12000, scoped, tag = 'internal scratch']
  %s0 = inlined_call_operand.hbm [shape: bf16[16,128], index: 0, kind: input, shape index: {}]
  %s1 = inlined_call_operand.hbm [shape: bf16[128,256], index: 1, kind: input, shape index: {}]
  %s2 = inlined_call_operand.vmem [shape: f32[1,256], index: 2, kind: input, shape index: {}]
  %s3 = inlined_call_operand.hbm [shape: bf16[256,128], index: 3, kind: input, shape index: {}]
  %s4 = inlined_call_operand.vmem [shape: f32[1,128], index: 4, kind: input, shape index: {}]
  %s5 = inlined_call_operand.hbm [shape: f32[16,128], index: 5, kind: output, shape index: {}]
  %s6 = sld [smem:[#allocation0]]
  $region42: #{tpu_custom_call.1} parent=0
    _
  %s8 = ssub.s32 1, %s6
  %s9 = scalar_select 0, %s8, %s6
  $region1: #{tpu_custom_call.1} parent=0
    #allocation2 [shape = 'u8[4096]{0}', space=vmem, size = 0x1000, scoped, tag = 'input window, operand 0, single buffered']
    #allocation3 [shape = 's32[1]{0}', space=sflag, size = 0x4, scoped, tag = 'scoped memory for tpu_custom_call.1']
    #allocation4 [shape = 's32[1]{0}', space=sflag, size = 0x4, scoped, tag = 'scoped memory for tpu_custom_call.1']
    #allocation5 [shape = 'u8[65536]{0}', space=vmem, size = 0x10000, scoped, tag = 'input window, operand 1, single buffered']
    #allocation6 [shape = 's32[1]{0}', space=sflag, size = 0x4, scoped, tag = 'scoped memory for tpu_custom_call.1']
    #allocation7 [shape = 'u8[65536]{0}', space=vmem, size = 0x10000, scoped, tag = 'input window, operand 3, single buffered']
    #allocation8 [shape = 'u8[8192]{0}', space=vmem, size = 0x2000, scoped, tag = 'output window, operand 0, single buffered']
    %10 = vsyncpa [#allocation3], 0
    %11 = vsyncpa [#allocation6], 0
    %12 = vsyncpa [#allocation4], 0
    // Predicated region
    $region2: #{tpu_custom_call.1} parent=1 // pred_check
      _
    $region3: #{tpu_custom_call.1} parent=1 // pred_check_branch
      %14 = sbr.rel (0) target = $region5
    $region4: #{tpu_custom_call.1} parent=1 // pred_region
      %s16 = ssub.s32 128, 128
      %17 = vsyncadd [#allocation3], %s16
      %s18 = sshll.u32 [#allocation2], 4
      %s19 = int_to_ptr.vmem [resolvable:$true] %s18
      %24 = dma.hbm_to_vmem [thread:$0]  %s0, 128, %s19, [#allocation3], 64, 64, 4
    $region5: #{tpu_custom_call.1} parent=1 // pred_fallthru
      _
    // Predicated region
    $region6: #{tpu_custom_call.1} parent=1 // pred_check
      _
    $region7: #{tpu_custom_call.1} parent=1 // pred_check_branch
      %26 = sbr.rel (0) target = $region9
    $region8: #{tpu_custom_call.1} parent=1 // pred_region
      %s28 = ssub.s32 2048, 2048
      %29 = vsyncadd [#allocation6], %s28
      %s30 = sshll.u32 [#allocation5], 4
      %s31 = int_to_ptr.vmem [resolvable:$true] %s30
      %36 = dma.hbm_to_vmem [thread:$0]  %s1, 2048, %s31, [#allocation6], 128, 128, 8
    $region9: #{tpu_custom_call.1} parent=1 // pred_fallthru
      _
    // Predicated region
    $region10: #{tpu_custom_call.1} parent=1 // pred_check
      _
    $region11: #{tpu_custom_call.1} parent=1 // pred_check_branch
      %38 = sbr.rel (0) target = $region13
    $region12: #{tpu_custom_call.1} parent=1 // pred_region
      _
    $region13: #{tpu_custom_call.1} parent=1 // pred_fallthru
      _
    // Predicated region
    $region14: #{tpu_custom_call.1} parent=1 // pred_check
      _
    $region15: #{tpu_custom_call.1} parent=1 // pred_check_branch
      %40 = sbr.rel (0) target = $region17
    $region16: #{tpu_custom_call.1} parent=1 // pred_region
      %s42 = ssub.s32 2048, 2048
      %43 = vsyncadd [#allocation6], %s42
      %s44 = sshll.u32 [#allocation7], 4
      %s45 = int_to_ptr.vmem [resolvable:$true] %s44
      %50 = dma.hbm_to_vmem [thread:$0]  %s3, 2048, %s45, [#allocation6], 64, 64, 4
    $region17: #{tpu_custom_call.1} parent=1 // pred_fallthru
      _
    // Predicated region
    $region18: #{tpu_custom_call.1} parent=1 // pred_check
      _
    $region19: #{tpu_custom_call.1} parent=1 // pred_check_branch
      %52 = sbr.rel (0) target = $region21
    $region20: #{tpu_custom_call.1} parent=1 // pred_region
      _
    $region21: #{tpu_custom_call.1} parent=1 // pred_fallthru
      _
    // Predicated region
    $region22: #{tpu_custom_call.1} parent=1 // pred_check
      _
    $region23: #{tpu_custom_call.1} parent=1 // pred_check_branch
      %54 = sbr.rel (0) target = $region25
    $region24: #{tpu_custom_call.1} parent=1 // pred_region
      %55 = dma.done [#allocation3], 128
    $region25: #{tpu_custom_call.1} parent=1 // pred_fallthru
      _
    // Predicated region
    $region26: #{tpu_custom_call.1} parent=1 // pred_check
      _
    $region27: #{tpu_custom_call.1} parent=1 // pred_check_branch
      %57 = sbr.rel (0) target = $region29
    $region28: #{tpu_custom_call.1} parent=1 // pred_region
      %58 = dma.done [#allocation6], 2048
    $region29: #{tpu_custom_call.1} parent=1 // pred_fallthru
      _
    // Predicated region
    $region30: #{tpu_custom_call.1} parent=1 // pred_check
      _
    $region31: #{tpu_custom_call.1} parent=1 // pred_check_branch
      %60 = sbr.rel (0) target = $region33
    $region32: #{tpu_custom_call.1} parent=1 // pred_region
      %61 = dma.done [#allocation6], 2048
    $region33: #{tpu_custom_call.1} parent=1 // pred_fallthru
      _
    %v63 = vld [vmem:[#allocation2] sm:$0xf]
    %v64 = vld [vmem:[#allocation2 + $0x4] sm:$0xf]
    %v65 = vld [vmem:[#allocation5] sm:$0xff]
    %v66 = vld [vmem:[#allocation5 + $0x8] sm:$0xff]
    %v67 = vld [vmem:[#allocation5 + $0x10] sm:$0xff]
    %v68 = vld [vmem:[#allocation5 + $0x18] sm:$0xff]
    %v69 = vld [vmem:[#allocation5 + $0x20] sm:$0xff]
    %v70 = vld [vmem:[#allocation5 + $0x28] sm:$0xff]
    %v71 = vld [vmem:[#allocation5 + $0x30] sm:$0xff]
    %v72 = vld [vmem:[#allocation5 + $0x38] sm:$0xff]
    %v73 = vld [vmem:[#allocation5 + $0x40] sm:$0xff]
    %v74 = vld [vmem:[#allocation5 + $0x48] sm:$0xff]
    %v75 = vld [vmem:[#allocation5 + $0x50] sm:$0xff]
    %v76 = vld [vmem:[#allocation5 + $0x58] sm:$0xff]
    %v77 = vld [vmem:[#allocation5 + $0x60] sm:$0xff]
    %v78 = vld [vmem:[#allocation5 + $0x68] sm:$0xff]
    %v79 = vld [vmem:[#allocation5 + $0x70] sm:$0xff]
    %v80 = vld [vmem:[#allocation5 + $0x78] sm:$0xff]
    %v81 = vld [vmem:[%s2] sm:$0x3]
    %v83 = vlaneseq
    %v84 = vshrl.u32 %v83, 7
    %v85 = vsub.s32 0, %v84
    %v86 = vrot.slane %v81, %v85
    %v87 = vlaneseq
    %v88 = vshrl.u32 %v87, 7
    %v89 = vsub.s32 1, %v88
    %v90 = vrot.slane %v81, %v89
    %v95 = vunpack.c.l.b16 %v63
    %v96 = vunpack.c.l.b16 %v64
    %v97 = vpack.c.b16 %v96, %v95
    %v115 = vunpack.c.l.b16 %v65
    %v116 = vunpack.c.h.b16 %v65
    %v117 = vunpack.c.l.b16 %v66
    %v118 = vunpack.c.h.b16 %v66
    %v119 = vunpack.c.l.b16 %v67
    %v120 = vunpack.c.h.b16 %v67
    %v121 = vunpack.c.l.b16 %v68
    %v122 = vunpack.c.h.b16 %v68
    %v123 = vunpack.c.l.b16 %v69
    %v124 = vunpack.c.h.b16 %v69
    %v125 = vunpack.c.l.b16 %v70
    %v126 = vunpack.c.h.b16 %v70
    %v127 = vunpack.c.l.b16 %v71
    %v128 = vunpack.c.h.b16 %v71
    %v129 = vunpack.c.l.b16 %v72
    %v130 = vunpack.c.h.b16 %v72
    %v131 = vunpack.c.l.b16 %v73
    %v132 = vunpack.c.h.b16 %v73
    %v133 = vunpack.c.l.b16 %v74
    %v134 = vunpack.c.h.b16 %v74
    %v135 = vunpack.c.l.b16 %v75
    %v136 = vunpack.c.h.b16 %v75
    %v137 = vunpack.c.l.b16 %v76
    %v138 = vunpack.c.h.b16 %v76
    %v139 = vunpack.c.l.b16 %v77
    %v140 = vunpack.c.h.b16 %v77
    %v141 = vunpack.c.l.b16 %v78
    %v142 = vunpack.c.h.b16 %v78
    %v143 = vunpack.c.l.b16 %v79
    %v144 = vunpack.c.h.b16 %v79
    %v145 = vunpack.c.l.b16 %v80
    %v146 = vunpack.c.h.b16 %v80
    %v147 = vpack.c.b16 %v117, %v115
    %v148 = vpack.c.b16 %v118, %v116
    %v149 = vpack.c.b16 %v121, %v119
    %v150 = vpack.c.b16 %v122, %v120
    %v151 = vpack.c.b16 %v125, %v123
    %v152 = vpack.c.b16 %v126, %v124
    %v153 = vpack.c.b16 %v129, %v127
    %v154 = vpack.c.b16 %v130, %v128
    %v155 = vpack.c.b16 %v133, %v131
    %v156 = vpack.c.b16 %v134, %v132
    %v157 = vpack.c.b16 %v137, %v135
    %v158 = vpack.c.b16 %v138, %v136
    %v159 = vpack.c.b16 %v141, %v139
    %v160 = vpack.c.b16 %v142, %v140
    %v161 = vpack.c.b16 %v145, %v143
    %v162 = vpack.c.b16 %v146, %v144
    %179 = vmatprep.subr.bf16.mxu0 %v148
    %180 = vmatpush1.bf16.msra.mxu0 %v147
    %181 = vmatprep.subr.bf16.mxu0 %v150
    %182 = vmatpush1.bf16.msra.mxu0 %v149
    %183 = vmatprep.subr.bf16.mxu0 %v152
    %184 = vmatpush1.bf16.msra.mxu0 %v151
    %185 = vmatprep.subr.bf16.mxu0 %v154
    %186 = vmatpush1.bf16.msra.mxu0 %v153
    %187 = vmatprep.subr.bf16.mxu0 %v156
    %188 = vmatpush1.bf16.msra.mxu0 %v155
    %189 = vmatprep.subr.bf16.mxu0 %v158
    %190 = vmatpush1.bf16.msra.mxu0 %v157
    %191 = vmatprep.subr.bf16.mxu0 %v160
    %192 = vmatpush1.bf16.msra.mxu0 %v159
    %193 = vmatprep.subr.bf16.mxu0 %v162
    %194 = vmatpush1.bf16.msra.mxu0 %v161
    %195 = vmatprep.subr.bf16.mxu0 0
    %196 = vmatpush1.bf16.msra.mxu0 0
    %197 = vmatprep.subr.bf16.mxu0 0
    %198 = vmatpush1.bf16.msra.mxu0 0
    %199 = vmatprep.subr.bf16.mxu0 0
    %200 = vmatpush1.bf16.msra.mxu0 0
    %201 = vmatprep.subr.bf16.mxu0 0
    %202 = vmatpush1.bf16.msra.mxu0 0
    %203 = vmatprep.subr.bf16.mxu0 0
    %204 = vmatpush1.bf16.msra.mxu0 0
    %205 = vmatprep.subr.bf16.mxu0 0
    %206 = vmatpush1.bf16.msra.mxu0 0
    %207 = vmatprep.subr.bf16.mxu0 0
    %208 = vmatpush1.bf16.msra.mxu0 0
    %209 = vmatprep.subr.bf16.mxu0 0
    %210 = vmatpush1.bf16.msra.mxu0 0
    %211 = vmatprep.mubr.bf16.mxu0 0
    %212 = vmatmul.mubr.bf16.gmra.mrb[0].mxu0 %v97
    %v213 = vpop.f32.mrb[0].mxu0
    %v214 = vadd.f32 %v86, %v213
    %v215 = vpop.f32.mrb[0].mxu0
    %v216 = vadd.f32 %v90, %v215
    %v217 = vpop.f32.mrb[0].mxu0
    %v218 = vadd.f32 %v86, %v217
    %v219 = vpop.f32.mrb[0].mxu0
    %v220 = vadd.f32 %v90, %v219
    %221 = vdwg.mxu0
    %v222 = vmax.f32 %v214, 0.0
    %v223 = vmax.f32 %v216, 0.0
    %v224 = vmax.f32 %v218, 0.0
    %v225 = vmax.f32 %v220, 0.0
    %v226 = vpack.c.bf16 %v224, %v222
    %v227 = vpack.c.bf16 %v225, %v223
    %v228 = vld [vmem:[#allocation7] sm:$0xf]
    %v229 = vld [vmem:[#allocation7 + $0x4] sm:$0xf]
    %v230 = vld [vmem:[#allocation7 + $0x8] sm:$0xf]
    %v231 = vld [vmem:[#allocation7 + $0xc] sm:$0xf]
    %v232 = vld [vmem:[#allocation7 + $0x10] sm:$0xf]
    %v233 = vld [vmem:[#allocation7 + $0x14] sm:$0xf]
    %v234 = vld [vmem:[#allocation7 + $0x18] sm:$0xf]
    %v235 = vld [vmem:[#allocation7 + $0x1c] sm:$0xf]
    %v236 = vld [vmem:[#allocation7 + $0x20] sm:$0xf]
    %v237 = vld [vmem:[#allocation7 + $0x24] sm:$0xf]
    %v238 = vld [vmem:[#allocation7 + $0x28] sm:$0xf]
    %v239 = vld [vmem:[#allocation7 + $0x2c] sm:$0xf]
    %v240 = vld [vmem:[#allocation7 + $0x30] sm:$0xf]
    %v241 = vld [vmem:[#allocation7 + $0x34] sm:$0xf]
    %v242 = vld [vmem:[#allocation7 + $0x38] sm:$0xf]
    %v243 = vld [vmem:[#allocation7 + $0x3c] sm:$0xf]
    %v244 = vld [vmem:[#allocation7 + $0x40] sm:$0xf]
    %v245 = vld [vmem:[#allocation7 + $0x44] sm:$0xf]
    %v246 = vld [vmem:[#allocation7 + $0x48] sm:$0xf]
    %v247 = vld [vmem:[#allocation7 + $0x4c] sm:$0xf]
    %v248 = vld [vmem:[#allocation7 + $0x50] sm:$0xf]
    %v249 = vld [vmem:[#allocation7 + $0x54] sm:$0xf]
    %v250 = vld [vmem:[#allocation7 + $0x58] sm:$0xf]
    %v251 = vld [vmem:[#allocation7 + $0x5c] sm:$0xf]
    %v252 = vld [vmem:[#allocation7 + $0x60] sm:$0xf]
    %v253 = vld [vmem:[#allocation7 + $0x64] sm:$0xf]
    %v254 = vld [vmem:[#allocation7 + $0x68] sm:$0xf]
    %v255 = vld [vmem:[#allocation7 + $0x6c] sm:$0xf]
    %v256 = vld [vmem:[#allocation7 + $0x70] sm:$0xf]
    %v257 = vld [vmem:[#allocation7 + $0x74] sm:$0xf]
    %v258 = vld [vmem:[#allocation7 + $0x78] sm:$0xf]
    %v259 = vld [vmem:[#allocation7 + $0x7c] sm:$0xf]
    %v260 = vld [vmem:[%s4] sm:$0x1]
    %v262 = vlaneseq
    %v263 = vshrl.u32 %v262, 7
    %v264 = vsub.s32 0, %v263
    %v265 = vrot.slane %v260, %v264
    %v299 = vunpack.c.l.b16 %v228
    %v300 = vunpack.c.l.b16 %v229
    %v301 = vunpack.c.l.b16 %v230
    %v302 = vunpack.c.l.b16 %v231
    %v303 = vunpack.c.l.b16 %v232
    %v304 = vunpack.c.l.b16 %v233
    %v305 = vunpack.c.l.b16 %v234
    %v306 = vunpack.c.l.b16 %v235
    %v307 = vunpack.c.l.b16 %v236
    %v308 = vunpack.c.l.b16 %v237
    %v309 = vunpack.c.l.b16 %v238
    %v310 = vunpack.c.l.b16 %v239
    %v311 = vunpack.c.l.b16 %v240
    %v312 = vunpack.c.l.b16 %v241
    %v313 = vunpack.c.l.b16 %v242
    %v314 = vunpack.c.l.b16 %v243
    %v315 = vunpack.c.l.b16 %v244
    %v316 = vunpack.c.l.b16 %v245
    %v317 = vunpack.c.l.b16 %v246
    %v318 = vunpack.c.l.b16 %v247
    %v319 = vunpack.c.l.b16 %v248
    %v320 = vunpack.c.l.b16 %v249
    %v321 = vunpack.c.l.b16 %v250
    %v322 = vunpack.c.l.b16 %v251
    %v323 = vunpack.c.l.b16 %v252
    %v324 = vunpack.c.l.b16 %v253
    %v325 = vunpack.c.l.b16 %v254
    %v326 = vunpack.c.l.b16 %v255
    %v327 = vunpack.c.l.b16 %v256
    %v328 = vunpack.c.l.b16 %v257
    %v329 = vunpack.c.l.b16 %v258
    %v330 = vunpack.c.l.b16 %v259
    %v331 = vpack.c.b16 %v300, %v299
    %v332 = vpack.c.b16 %v302, %v301
    %v333 = vpack.c.b16 %v304, %v303
    %v334 = vpack.c.b16 %v306, %v305
    %v335 = vpack.c.b16 %v308, %v307
    %v336 = vpack.c.b16 %v310, %v309
    %v337 = vpack.c.b16 %v312, %v311
    %v338 = vpack.c.b16 %v314, %v313
    %v339 = vpack.c.b16 %v316, %v315
    %v340 = vpack.c.b16 %v318, %v317
    %v341 = vpack.c.b16 %v320, %v319
    %v342 = vpack.c.b16 %v322, %v321
    %v343 = vpack.c.b16 %v324, %v323
    %v344 = vpack.c.b16 %v326, %v325
    %v345 = vpack.c.b16 %v328, %v327
    %v346 = vpack.c.b16 %v330, %v329
    %363 = vmatprep.subr.bf16.mxu0 0
    %364 = vmatpush1.bf16.msra.mxu0 %v331
    %365 = vmatprep.subr.bf16.mxu0 0
    %366 = vmatpush1.bf16.msra.mxu0 %v332
    %367 = vmatprep.subr.bf16.mxu0 0
    %368 = vmatpush1.bf16.msra.mxu0 %v333
    %369 = vmatprep.subr.bf16.mxu0 0
    %370 = vmatpush1.bf16.msra.mxu0 %v334
    %371 = vmatprep.subr.bf16.mxu0 0
    %372 = vmatpush1.bf16.msra.mxu0 %v335
    %373 = vmatprep.subr.bf16.mxu0 0
    %374 = vmatpush1.bf16.msra.mxu0 %v336
    %375 = vmatprep.subr.bf16.mxu0 0
    %376 = vmatpush1.bf16.msra.mxu0 %v337
    %377 = vmatprep.subr.bf16.mxu0 0
    %378 = vmatpush1.bf16.msra.mxu0 %v338
    %379 = vmatprep.subr.bf16.mxu0 0
    %380 = vmatpush1.bf16.msra.mxu0 %v339
    %381 = vmatprep.subr.bf16.mxu0 0
    %382 = vmatpush1.bf16.msra.mxu0 %v340
    %383 = vmatprep.subr.bf16.mxu0 0
    %384 = vmatpush1.bf16.msra.mxu0 %v341
    %385 = vmatprep.subr.bf16.mxu0 0
    %386 = vmatpush1.bf16.msra.mxu0 %v342
    %387 = vmatprep.subr.bf16.mxu0 0
    %388 = vmatpush1.bf16.msra.mxu0 %v343
    %389 = vmatprep.subr.bf16.mxu0 0
    %390 = vmatpush1.bf16.msra.mxu0 %v344
    %391 = vmatprep.subr.bf16.mxu0 0
    %392 = vmatpush1.bf16.msra.mxu0 %v345
    %393 = vmatprep.subr.bf16.mxu0 0
    %394 = vmatpush1.bf16.msra.mxu0 %v346
    %395 = vmatprep.mubr.bf16.mxu0 %v227
    %396 = vmatmul.mubr.bf16.gmra.mrb[0].mxu0 %v226
    %v397 = vpop.f32.mrb[0].mxu0
    %v398 = vadd.f32 %v265, %v397
    %v399 = vpop.f32.mrb[0].mxu0
    %v400 = vpop.f32.mrb[0].mxu0
    %v401 = vadd.f32 %v265, %v400
    %v402 = vpop.f32.mrb[0].mxu0
    %403 = vdwg.mxu0
    %404 = vst [vmem:[#allocation8] sm:$0xff] %v398
    %405 = vst [vmem:[#allocation8 + $0x8] sm:$0xff] %v401
    // Predicated region
    $region34: #{tpu_custom_call.1} parent=1 // pred_check
      _
    $region35: #{tpu_custom_call.1} parent=1 // pred_check_branch
      %407 = sbr.rel (0) target = $region37
    $region36: #{tpu_custom_call.1} parent=1 // pred_region
      %s409 = ssub.s32 256, 256
      %410 = vsyncadd [#allocation4], %s409
      %s411 = sshll.u32 [#allocation8], 4
      %s412 = int_to_ptr.vmem [resolvable:$true] %s411
      %417 = dma.vmem_to_hbm [thread:$0]  %s412, 256, %s5, [#allocation4], 128, 128, 8
    $region37: #{tpu_custom_call.1} parent=1 // pred_fallthru
      _
    // Predicated region
    $region38: #{tpu_custom_call.1} parent=1 // pred_check
      _
    $region39: #{tpu_custom_call.1} parent=1 // pred_check_branch
      %419 = sbr.rel (0) target = $region41
    $region40: #{tpu_custom_call.1} parent=1 // pred_region
      %420 = dma.done [#allocation4], 256
    $region41: #{tpu_custom_call.1} parent=1 // pred_fallthru
      _
    %421 = vsyncpa [#allocation3], 1
    %422 = vsyncpa [#allocation6], 1
    %423 = vsyncpa [#allocation4], 1

</llo_original>
